<compile_context>
chip_gen: v6e
topology: v6e:2x2x1
jax: 0.10.0
libtpu: 0.0.40
codegen_flags: <defaults>
</compile_context>

<pallas_src>
import functools
import math

import jax
import jax.numpy as jnp
from jax import lax
from jax.experimental import pallas as pl
from jax.experimental.pallas import tpu as pltpu


# ----------------------------- in-kernel helpers ----------------------------------------

def _layernorm(x, gamma, beta, eps=1e-5):
    mu = jnp.mean(x, axis=-1, keepdims=True)
    var = jnp.mean(jnp.square(x - mu), axis=-1, keepdims=True)
    return (x - mu) * lax.rsqrt(var + eps) * gamma + beta


def _erf_poly(x):
    # Abramowitz & Stegun 7.1.26, |err| < 1.5e-7: erf-exact GELU within f32 noise.
    p = 0.3275911
    a1, a2, a3, a4, a5 = (0.254829592, -0.284496736, 1.421413741,
                          -1.453152027, 1.061405429)
    s = jnp.where(x >= 0.0, 1.0, -1.0)
    ax = jnp.abs(x)
    t = 1.0 / (1.0 + p * ax)
    poly = ((((a5 * t + a4) * t + a3) * t + a2) * t + a1) * t
    return s * (1.0 - poly * jnp.exp(-ax * ax))


def _gelu_exact(x):
    return 0.5 * x * (1.0 + _erf_poly(x * (2.0 ** -0.5)))


# ----------------------------- pass 1: global key-feature max ---------------------------

def _kmax_kernel(x_ref, g1_ref, b1_ref, wk_ref, projbd_ref, kmax_ref):
    t = pl.program_id(1)

    @pl.when(t == 0)
    def _():
        kmax_ref[...] = jnp.full_like(kmax_ref, -jnp.inf)

    x = x_ref[0]                                                        # (TN, D)
    h1 = _layernorm(x, g1_ref[...], b1_ref[...])
    k2 = jnp.dot(h1.astype(jnp.bfloat16), wk_ref[...],
                 preferred_element_type=jnp.float32)                    # (TN, inner)
    kd = jnp.dot(k2, projbd_ref[...], preferred_element_type=jnp.float32)  # (TN, H*M)
    kmax_ref[...] = jnp.maximum(kmax_ref[...], jnp.max(kd))


# ----------------------------- pass 2: key/value statistics -----------------------------

def _kv_stats_kernel(kmax_ref, x_ref, g1_ref, b1_ref, wk_ref, wv_ref, projbd_ref,
                     ksum_ref, ctx_ref, *, heads, dim_head, nb_features,
                     diag_c, ratio, feps):
    t = pl.program_id(1)
    f32 = jnp.float32
    M, dh = nb_features, dim_head

    @pl.when(t == 0)
    def _():
        ksum_ref[...] = jnp.zeros_like(ksum_ref)
        ctx_ref[...] = jnp.zeros_like(ctx_ref)

    x = x_ref[0]                                                        # (TN, D)
    h1 = _layernorm(x, g1_ref[...], b1_ref[...]).astype(jnp.bfloat16)
    k2 = jnp.dot(h1, wk_ref[...], preferred_element_type=f32)           # (TN, inner)
    v2 = jnp.dot(h1, wv_ref[...], preferred_element_type=f32)           # (TN, inner)
    kd_all = jnp.dot(k2, projbd_ref[...], preferred_element_type=f32)   # (TN, H*M)
    kmax = kmax_ref[0]

    ksum_parts, ctx_parts = [], []
    for h in range(heads):                                              # small static loop
        kh = k2[:, h * dh:(h + 1) * dh]                                 # (TN, dh)
        kd = kd_all[:, h * M:(h + 1) * M]                               # (TN, M)
        dk = jnp.sum(kh * kh, axis=-1, keepdims=True) * diag_c
        kp = ratio * (jnp.exp(kd - dk - kmax) + feps)                   # (TN, M)
        ksum_parts.append(jnp.sum(kp, axis=0, keepdims=True))           # (1, M)
        vh = v2[:, h * dh:(h + 1) * dh]                                 # (TN, dh)
        # contract over the sequence-tile axis without materializing kp.T
        ctx_parts.append(lax.dot_general(
            kp, vh, dimension_numbers=(((0,), (0,)), ((), ())),
            preferred_element_type=f32))                                # (M, dh)

    ksum_ref[...] += jnp.concatenate(ksum_parts, axis=0)[None]          # (1, H, M)
    ctx_ref[...] += jnp.concatenate(ctx_parts, axis=0)[None]            # (1, H*M, dh)


# ----------------------------- pass 3: attention + feed-forward -------------------------

def _attn_ff_kernel(x_ref, g1_ref, b1_ref, wq_ref, projbd_ref, ksum_ref, ctx_ref,
                    wo_ref, bo_ref, g2_ref, b2_ref, w1_ref, fb1_ref, w2_ref, fb2_ref,
                    y_ref, *, heads, dim_head, nb_features, diag_c, ratio, feps):
    f32, bf16 = jnp.float32, jnp.bfloat16
    M, dh = nb_features, dim_head

    x = x_ref[0]                                                        # (TN, D)
    h1 = _layernorm(x, g1_ref[...], b1_ref[...])
    q2 = jnp.dot(h1.astype(bf16), wq_ref[...], preferred_element_type=f32)   # (TN, inner)
    qd_all = jnp.dot(q2, projbd_ref[...], preferred_element_type=f32)        # (TN, H*M)

    o_parts = []
    for h in range(heads):                                              # small static loop
        qh = q2[:, h * dh:(h + 1) * dh]                                 # (TN, dh)
        qd = qd_all[:, h * M:(h + 1) * M]                               # (TN, M)
        dq = jnp.sum(qh * qh, axis=-1, keepdims=True) * diag_c
        qp = ratio * (jnp.exp(qd - dq - jnp.max(qd, axis=-1, keepdims=True)) + feps)
        ksum_h = ksum_ref[0, h:h + 1, :]                                # (1, M)
        denom = jnp.sum(qp * ksum_h, axis=-1, keepdims=True)            # (TN, 1)
        dinv = pl.reciprocal(denom, approx=True)
        ctx_h = ctx_ref[0, h * M:(h + 1) * M, :]                        # (M, dh)
        o_parts.append(jnp.dot(qp * dinv, ctx_h, preferred_element_type=f32))  # (TN, dh)
    o = jnp.concatenate(o_parts, axis=1)                                # (TN, inner)

    attn = jnp.dot(o.astype(bf16), wo_ref[...], preferred_element_type=f32) + bo_ref[...]
    x1 = x + attn

    h2 = _layernorm(x1, g2_ref[...], b2_ref[...])
    u = jnp.dot(h2.astype(bf16), w1_ref[...], preferred_element_type=f32) + fb1_ref[...]
    u = _gelu_exact(u)
    ff = jnp.dot(u.astype(bf16), w2_ref[...], preferred_element_type=f32) + fb2_ref[...]
    y_ref[0] = x1 + ff
    # TODO(synk): dropout layers are training-only; treated as identity (eval semantics).


# ----------------------------- wrapper ---------------------------------------------------

def performer_block(x, params, *, heads, dim_head, nb_features, tile_n=None):
    (g1, b1, wq, wk, wv, projt, wo, bo, g2, b2, w1, fb1, w2, fb2) = params
    B, N, D = x.shape
    inner = heads * dim_head
    hidden = w1.shape[1]
    M = nb_features
    f32, bf16 = jnp.float32, jnp.bfloat16

    if tile_n is None:
        tile_n = next((t for t in (512, 256, 128, 64, 32, 16, 8) if N % t == 0), N)
    # TODO(synk): ragged sequence lengths would need padded tiles + row masking.
    assert N % tile_n == 0, "sequence length must be divisible by the sequence tile"
    n_t = N // tile_n

    dnorm = float(dim_head) ** -0.25
    diag_c = 0.5 * dnorm * dnorm
    ratio = float(M) ** -0.5
    feps = 1e-4

    # Fold the q/k scaling into a block-diagonal "all heads at once" random-feature
    # projection (inner, heads*M): one lane-dense matmul produces every head's features.
    projbd = jnp.kron(jnp.eye(heads, dtype=f32), (projt * dnorm).astype(f32))

    # bf16 copies of the big matmul weights (MXU accumulation stays f32).
    wq_b, wk_b, wv_b = wq.astype(bf16), wk.astype(bf16), wv.astype(bf16)
    wo_b, w1_b, w2_b = wo.astype(bf16), w1.astype(bf16), w2.astype(bf16)

    def cparams(sems):
        return pltpu.CompilerParams(dimension_semantics=sems,
                                    vmem_limit_bytes=48 * 1024 * 1024)

    def const(shape):
        return pl.BlockSpec(shape, lambda b, t, _s=len(shape): (0,) * _s)

    x_spec = pl.BlockSpec((1, tile_n, D), lambda b, t: (b, t, 0))
    smem_spec = pl.BlockSpec(memory_space=pltpu.MemorySpace.SMEM)

    # ---- pass 1: global key-feature max (matches torch.max(data_dash)) -----------------
    kmax_blk = pl.pallas_call(
        _kmax_kernel,
        grid=(B, n_t),
        in_specs=[x_spec, const((1, D)), const((1, D)),
                  const((D, inner)), const((inner, heads * M))],
        out_specs=pl.BlockSpec((1, 8, 128), lambda b, t: (b, 0, 0)),
        out_shape=jax.ShapeDtypeStruct((B, 8, 128), f32),
        compiler_params=cparams(("parallel", "arbitrary")),
    )(x, g1, b1, wk_b, projbd)
    kmax = jnp.max(kmax_blk).reshape(1)          # (1,) scalar, passed via SMEM below

    # ---- pass 2: per-batch key statistics, accumulated over sequence tiles -------------
    kv_kernel = functools.partial(
        _kv_stats_kernel, heads=heads, dim_head=dim_head, nb_features=M,
        diag_c=diag_c, ratio=ratio, feps=feps)
    ksum, ctx = pl.pallas_call(
        kv_kernel,
        grid=(B, n_t),
        in_specs=[smem_spec, x_spec, const((1, D)), const((1, D)),
                  const((D, inner)), const((D, inner)), const((inner, heads * M))],
        out_specs=(pl.BlockSpec((1, heads, M), lambda b, t: (b, 0, 0)),
                   pl.BlockSpec((1, heads * M, dim_head), lambda b, t: (b, 0, 0))),
        out_shape=(jax.ShapeDtypeStruct((B, heads, M), f32),
                   jax.ShapeDtypeStruct((B, heads * M, dim_head), f32)),
        compiler_params=cparams(("parallel", "arbitrary")),
    )(kmax, x, g1, b1, wk_b, wv_b, projbd)

    # ---- pass 3: queries -> attention -> out-proj -> residual -> LN -> FF -> residual --
    main_kernel = functools.partial(
        _attn_ff_kernel, heads=heads, dim_head=dim_head, nb_features=M,
        diag_c=diag_c, ratio=ratio, feps=feps)
    y = pl.pallas_call(
        main_kernel,
        grid=(B, n_t),
        in_specs=[x_spec, const((1, D)), const((1, D)),
                  const((D, inner)), const((inner, heads * M)),
                  pl.BlockSpec((1, heads, M), lambda b, t: (b, 0, 0)),
                  pl.BlockSpec((1, heads * M, dim_head), lambda b, t: (b, 0, 0)),
                  const((inner, D)), const((1, D)),
                  const((1, D)), const((1, D)),
                  const((D, hidden)), const((1, hidden)),
                  const((hidden, D)), const((1, D))],
        out_specs=x_spec,
        out_shape=jax.ShapeDtypeStruct((B, N, D), f32),
        compiler_params=cparams(("parallel", "parallel")),
    )(x, g1, b1, wq_b, projbd, ksum, ctx, wo_b, bo, g2, b2, w1_b, fb1, w2_b, fb2)
    return y


# ----------------------------- parameter init (glue) ------------------------------------

def gaussian_orthogonal_random_matrix(key, nb_rows, nb_cols):
    """performer_pytorch's gaussian_orthogonal_random_matrix, scaling=0."""
    nb_full_blocks = nb_rows // nb_cols
    keys = jax.random.split(key, nb_full_blocks + 2)
    blocks = []
    for i in range(nb_full_blocks):
        g = jax.random.normal(keys[i], (nb_cols, nb_cols), jnp.float32)
        q, _ = jnp.linalg.qr(g)
        blocks.append(q.T)
    rem = nb_rows - nb_full_blocks * nb_cols
    if rem > 0:
        g = jax.random.normal(keys[nb_full_blocks], (nb_cols, nb_cols), jnp.float32)
        q, _ = jnp.linalg.qr(g)
        blocks.append(q.T[:rem])
    final = jnp.concatenate(blocks, axis=0)
    multiplier = jnp.linalg.norm(
        jax.random.normal(keys[-1], (nb_rows, nb_cols), jnp.float32), axis=1)
    return multiplier[:, None] * final


def init_params(key, dim, heads, dim_head, nb_features):
    inner = heads * dim_head
    hidden = dim * 4
    ks = jax.random.split(key, 10)

    def lin(k, fan_in, shape):
        bound = 1.0 / math.sqrt(fan_in)
        return jax.random.uniform(k, shape, jnp.float32, -bound, bound)

    g1 = jnp.ones((1, dim), jnp.float32)
    b1 = jnp.zeros((1, dim), jnp.float32)
    g2 = jnp.ones((1, dim), jnp.float32)
    b2 = jnp.zeros((1, dim), jnp.float32)
    wq = lin(ks[0], dim, (dim, inner))        # qkv_bias=False (performer default)
    wk = lin(ks[1], dim, (dim, inner))
    wv = lin(ks[2], dim, (dim, inner))
    wo = lin(ks[3], inner, (inner, dim))
    bo = lin(ks[4], inner, (1, dim))
    w1 = lin(ks[5], dim, (dim, hidden))
    fb1 = lin(ks[6], dim, (1, hidden))
    w2 = lin(ks[7], hidden, (hidden, dim))
    fb2 = lin(ks[8], hidden, (1, dim))
    proj = gaussian_orthogonal_random_matrix(ks[9], nb_features, dim_head)   # (M, dh)
    projt = proj.T                                                           # (dh, M)
    return (g1, b1, wq, wk, wv, projt, wo, bo, g2, b2, w1, fb1, w2, fb2)


# ----------------------------- pure-JAX reference (sanity check) ------------------------

def reference_forward(x, p, heads, dim_head, nb_features):
    (g1, b1, wq, wk, wv, projt, wo, bo, g2, b2, w1, fb1, w2, fb2) = p
    proj = projt.T
    hp = jax.lax.Precision.HIGHEST

    def ln(t, g, bb):
        mu = t.mean(-1, keepdims=True)
        var = ((t - mu) ** 2).mean(-1, keepdims=True)
        return (t - mu) / jnp.sqrt(var + 1e-5) * g + bb

    B, N, D = x.shape
    h = ln(x, g1, b1)

    def split(t):
        return t.reshape(B, N, heads, dim_head).transpose(0, 2, 1, 3)

    q = split(h @ wq)
    k = split(h @ wk)
    v = split(h @ wv)
    dn = dim_head ** -0.25
    ratio = nb_features ** -0.5
    eps = 1e-4
    qd = jnp.einsum('bhnd,md->bhnm', q * dn, proj, precision=hp)
    kd = jnp.einsum('bhnd,md->bhnm', k * dn, proj, precision=hp)
    dq = (q * q).sum(-1, keepdims=True) * 0.5 * dn * dn
    dk = (k * k).sum(-1, keepdims=True) * 0.5 * dn * dn
    qp = ratio * (jnp.exp(qd - dq - qd.max(-1, keepdims=True)) + eps)
    kp = ratio * (jnp.exp(kd - dk - kd.max()) + eps)
    ksum = kp.sum(-2)
    dinv = 1.0 / jnp.einsum('bhnm,bhm->bhn', qp, ksum, precision=hp)
    ctx = jnp.einsum('bhnm,bhne->bhme', kp, v, precision=hp)
    o = jnp.einsum('bhme,bhnm,bhn->bhne', ctx, qp, dinv, precision=hp)
    o = o.transpose(0, 2, 1, 3).reshape(B, N, heads * dim_head)
    x1 = x + (o @ wo + bo)
    h2 = ln(x1, g2, b2)
    u = h2 @ w1 + fb1
    u = 0.5 * u * (1.0 + jax.lax.erf(u * (2.0 ** -0.5)))   # exact GELU
    return x1 + (u @ w2 + fb2)


# ----------------------------- main ------------------------------------------------------

if __name__ == "__main__":
    B, N, D = 2, 128, 32
    heads = 4
    dim_head = D // heads                                  # 8
    nb_features = int(dim_head * math.log(dim_head))       # 16 (performer default)

    key = jax.random.PRNGKey(0)
    kx, kp = jax.random.split(key)
    x = jax.random.normal(kx, (B, N, D), jnp.float32)
    params = init_params(kp, D, heads, dim_head, nb_features)

    out = performer_block(x, params, heads=heads, dim_head=dim_head,
                          nb_features=nb_features, tile_n=64)   # grid (2 batches, 2 seq tiles)
    out = jax.block_until_ready(out)

    ref = reference_forward(x, params, heads, dim_head, nb_features)
    assert out.shape == ref.shape == (B, N, D)
    if not bool(jnp.allclose(out, ref, atol=5e-2, rtol=5e-2)):
        raise AssertionError(
            f"kernel/reference mismatch, max|diff|={float(jnp.max(jnp.abs(out - ref)))}")

    print("KERNEL_OK")
</pallas_src>

<mosaic_0001>
module attributes {stable_mosaic.version = 11 : i64} {
  func.func @_kmax_kernel(%arg0: i32, %arg1: i32, %arg2: memref<1x64x32xf32, #tpu.memory_space<vmem>>, %arg3: memref<1x32xf32, #tpu.memory_space<vmem>>, %arg4: memref<1x32xf32, #tpu.memory_space<vmem>>, %arg5: memref<32x32xbf16, #tpu.memory_space<vmem>>, %arg6: memref<32x64xf32, #tpu.memory_space<vmem>>, %arg7: memref<1x8x128xf32, #tpu.memory_space<vmem>>) attributes {dimension_semantics = [#tpu.dimension_semantics<parallel>, #tpu.dimension_semantics<arbitrary>], iteration_bounds = array<i64: 2, 2>, scalar_prefetch = 0 : i64, scratch_operands = 0 : i64, tpu.core_type = #tpu.core_type<tc>, window_params = [{transform_indices = @transform_0, window_bounds = array<i64: 1, 64, 32>}, {pipeline_mode = #tpu.pipeline_mode<synchronous>, transform_indices = @transform_1, window_bounds = array<i64: 1, 32>}, {pipeline_mode = #tpu.pipeline_mode<synchronous>, transform_indices = @transform_2, window_bounds = array<i64: 1, 32>}, {pipeline_mode = #tpu.pipeline_mode<synchronous>, transform_indices = @transform_3, window_bounds = array<i64: 32, 32>}, {pipeline_mode = #tpu.pipeline_mode<synchronous>, transform_indices = @transform_4, window_bounds = array<i64: 32, 64>}, {transform_indices = @transform_5, window_bounds = array<i64: 1, 8, 128>}]} {
    %c0_i32 = arith.constant 0 : i32
    %0 = arith.cmpi eq, %arg1, %c0_i32 : i32
    %1 = arith.extui %0 : i1 to i32
    %c0_i32_0 = arith.constant 0 : i32
    %2 = arith.cmpi ne, %1, %c0_i32_0 : i32
    scf.if %2 {
      %cst_24 = arith.constant 0xFF800000 : f32
      %42 = vector.broadcast %cst_24 : f32 to vector<1x8x128xf32>
      %c0_25 = arith.constant 0 : index
      %c0_26 = arith.constant 0 : index
      %c0_27 = arith.constant 0 : index
      %43 = vector.load %arg7[%c0_25, %c0_26, %c0_27] : memref<1x8x128xf32, #tpu.memory_space<vmem>>, vector<1x8x128xf32>
      tpu.vector_store %arg7[%c0_25, %c0_26, %c0_27], %42 {strides = array<i32>} : memref<1x8x128xf32, #tpu.memory_space<vmem>>, vector<1x8x128xf32>,
    } else {
    }
    %c0 = arith.constant 0 : index
    %c0_1 = arith.constant 0 : index
    %c0_2 = arith.constant 0 : index
    %3 = vector.load %arg2[%c0, %c0_1, %c0_2] : memref<1x64x32xf32, #tpu.memory_space<vmem>>, vector<1x64x32xf32>
    %4 = vector.shape_cast %3 : vector<1x64x32xf32> to vector<64x32xf32>
    %c0_3 = arith.constant 0 : index
    %c0_4 = arith.constant 0 : index
    %5 = vector.load %arg3[%c0_3, %c0_4] : memref<1x32xf32, #tpu.memory_space<vmem>>, vector<1x32xf32>
    %c0_5 = arith.constant 0 : index
    %c0_6 = arith.constant 0 : index
    %6 = vector.load %arg4[%c0_5, %c0_6] : memref<1x32xf32, #tpu.memory_space<vmem>>, vector<1x32xf32>
    %cst = arith.constant dense<0.000000e+00> : vector<64xf32>
    %7 = vector.multi_reduction <add>, %4, %cst [1] : vector<64x32xf32> to vector<64xf32>
    %8 = vector.shape_cast %7 : vector<64xf32> to vector<64x1xf32>
    %cst_7 = arith.constant 3.200000e+01 : f32
    %9 = vector.broadcast %cst_7 : f32 to vector<64x1xf32>
    %10 = arith.divf %8, %9 : vector<64x1xf32>
    %11 = vector.broadcast %10 : vector<64x1xf32> to vector<64x32xf32>
    %12 = arith.subf %4, %11 : vector<64x32xf32>
    %13 = arith.mulf %12, %12 : vector<64x32xf32>
    %cst_8 = arith.constant dense<0.000000e+00> : vector<64xf32>
    %14 = vector.multi_reduction <add>, %13, %cst_8 [1] : vector<64x32xf32> to vector<64xf32>
    %15 = vector.shape_cast %14 : vector<64xf32> to vector<64x1xf32>
    %cst_9 = arith.constant 3.200000e+01 : f32
    %16 = vector.broadcast %cst_9 : f32 to vector<64x1xf32>
    %17 = arith.divf %15, %16 : vector<64x1xf32>
    %18 = vector.broadcast %10 : vector<64x1xf32> to vector<64x32xf32>
    %19 = arith.subf %4, %18 : vector<64x32xf32>
    %cst_10 = arith.constant 9.99999974E-6 : f32
    %20 = vector.broadcast %cst_10 : f32 to vector<64x1xf32>
    %21 = arith.addf %17, %20 : vector<64x1xf32>
    %22 = math.rsqrt %21 : vector<64x1xf32>
    %23 = vector.broadcast %22 : vector<64x1xf32> to vector<64x32xf32>
    %24 = arith.mulf %19, %23 : vector<64x32xf32>
    %25 = vector.broadcast %5 : vector<1x32xf32> to vector<64x32xf32>
    %26 = arith.mulf %24, %25 : vector<64x32xf32>
    %27 = vector.broadcast %6 : vector<1x32xf32> to vector<64x32xf32>
    %28 = arith.addf %26, %27 : vector<64x32xf32>
    %29 = arith.truncf %28 : vector<64x32xf32> to vector<64x32xbf16>
    %c0_11 = arith.constant 0 : index
    %c0_12 = arith.constant 0 : index
    %30 = vector.load %arg5[%c0_11, %c0_12] : memref<32x32xbf16, #tpu.memory_space<vmem>>, vector<32x32xbf16>
    %cst_13 = arith.constant dense<0.000000e+00> : vector<64x32xf32>
    %31 = tpu.matmul %29, %30, %cst_13 {dimension_numbers = #tpu.dot_dimension_numbers<[1], [0], [0], [1], [0, 0, 1, 1], [], []>} : vector<64x32xbf16>, vector<32x32xbf16>, vector<64x32xf32> -> vector<64x32xf32>
    %c0_14 = arith.constant 0 : index
    %c0_15 = arith.constant 0 : index
    %32 = vector.load %arg6[%c0_14, %c0_15] : memref<32x64xf32, #tpu.memory_space<vmem>>, vector<32x64xf32>
    %cst_16 = arith.constant dense<0.000000e+00> : vector<64x64xf32>
    %33 = tpu.matmul %31, %32, %cst_16 {dimension_numbers = #tpu.dot_dimension_numbers<[1], [0], [0], [1], [0, 0, 1, 1], [], []>} : vector<64x32xf32>, vector<32x64xf32>, vector<64x64xf32> -> vector<64x64xf32>
    %c0_17 = arith.constant 0 : index
    %c0_18 = arith.constant 0 : index
    %c0_19 = arith.constant 0 : index
    %34 = vector.load %arg7[%c0_17, %c0_18, %c0_19] : memref<1x8x128xf32, #tpu.memory_space<vmem>>, vector<1x8x128xf32>
    %35 = vector.shape_cast %33 : vector<64x64xf32> to vector<1x64x64xf32>
    %cst_20 = arith.constant dense<0xFF800000> : vector<1xf32>
    %36 = vector.multi_reduction <maximumf>, %35, %cst_20 [1, 2] : vector<1x64x64xf32> to vector<1xf32>
    %37 = vector.shape_cast %36 : vector<1xf32> to vector<1x1x1xf32>
    %38 = vector.extract %37[0, 0, 0] : f32 from vector<1x1x1xf32>
    %39 = vector.broadcast %38 : f32 to vector<1x8x128xf32>
    %40 = arith.maximumf %34, %39 : vector<1x8x128xf32>
    %c0_21 = arith.constant 0 : index
    %c0_22 = arith.constant 0 : index
    %c0_23 = arith.constant 0 : index
    %41 = vector.load %arg7[%c0_21, %c0_22, %c0_23] : memref<1x8x128xf32, #tpu.memory_space<vmem>>, vector<1x8x128xf32>
    tpu.vector_store %arg7[%c0_21, %c0_22, %c0_23], %40 {strides = array<i32>} : memref<1x8x128xf32, #tpu.memory_space<vmem>>, vector<1x8x128xf32>,
    return
  }
  func.func @transform_0(%arg0: i32, %arg1: i32) -> (i32, i32, i32) {
    %c0_i32 = arith.constant 0 : i32
    %c0_i32_0 = arith.constant 0 : i32
    return %arg0, %arg1, %c0_i32 : i32, i32, i32
  }
  func.func @transform_1(%arg0: i32, %arg1: i32) -> (i32, i32) {
    %c0_i32 = arith.constant 0 : i32
    %c0_i32_0 = arith.constant 0 : i32
    %c0_i32_1 = arith.constant 0 : i32
    return %c0_i32, %c0_i32_0 : i32, i32
  }
  func.func @transform_2(%arg0: i32, %arg1: i32) -> (i32, i32) {
    %c0_i32 = arith.constant 0 : i32
    %c0_i32_0 = arith.constant 0 : i32
    %c0_i32_1 = arith.constant 0 : i32
    return %c0_i32, %c0_i32_0 : i32, i32
  }
  func.func @transform_3(%arg0: i32, %arg1: i32) -> (i32, i32) {
    %c0_i32 = arith.constant 0 : i32
    %c0_i32_0 = arith.constant 0 : i32
    %c0_i32_1 = arith.constant 0 : i32
    return %c0_i32, %c0_i32_0 : i32, i32
  }
  func.func @transform_4(%arg0: i32, %arg1: i32) -> (i32, i32) {
    %c0_i32 = arith.constant 0 : i32
    %c0_i32_0 = arith.constant 0 : i32
    %c0_i32_1 = arith.constant 0 : i32
    return %c0_i32, %c0_i32_0 : i32, i32
  }
  func.func @transform_5(%arg0: i32, %arg1: i32) -> (i32, i32, i32) {
    %c0_i32 = arith.constant 0 : i32
    %c0_i32_0 = arith.constant 0 : i32
    %c0_i32_1 = arith.constant 0 : i32
    return %arg0, %c0_i32, %c0_i32_0 : i32, i32, i32
  }
}

</mosaic_0001>

<llo_original>
// kernel: tpu_custom_call.1
$region0: #{tpu_custom_call.1}
  #allocation0 [shape = 'u32[]', space=smem, size = 0x4, offset = 0x4, fixed_abs, tag = 'smem constant byte address 0x4 - core index']
  #allocation1 [shape = 'u32[144,128]{1,0:T(1,128)}', space=vmem, size = 0x12000, scoped, tag = 'internal scratch']
  %s0 = inlined_call_operand.vmem [shape: f32[2,128,32], index: 0, kind: input, shape index: {}]
  %s1 = inlined_call_operand.vmem [shape: f32[1,32], index: 1, kind: input, shape index: {}]
  %s2 = inlined_call_operand.vmem [shape: f32[1,32], index: 2, kind: input, shape index: {}]
  %s3 = inlined_call_operand.vmem [shape: bf16[32,32], index: 3, kind: input, shape index: {}]
  %s4 = inlined_call_operand.vmem [shape: f32[32,64], index: 4, kind: input, shape index: {}]
  %s5 = inlined_call_operand.hbm [shape: f32[2,8,128], index: 5, kind: output, shape index: {}]
  %s6 = sld [smem:[#allocation0]]
  $region57: #{tpu_custom_call.1} parent=0
    _
  %s8 = ssub.s32 1, %s6
  %s9 = scalar_select 0, %s8, %s6
  $region1: #{tpu_custom_call.1} parent=0
    #allocation2 [shape = 'u8[8192]{0}', space=vmem, size = 0x2000, scoped, tag = 'output window, operand 0']
    #allocation3 [shape = 's32[2]{0}', space=sflag, size = 0x8, scoped, tag = 'scoped memory for tpu_custom_call.1']
    %10 = vsyncpa [#allocation3], 0
    %s11 = scalar_lea.sflag [#allocation3], 1
    %12 = vsyncpa %s11, 0
    loop: start=0, step=1, limit=6
    $region2: #{tpu_custom_call.1} parent=1 // loop_pre_header
      _
    $region3: #{tpu_custom_call.1} parent=1 // loop_header
      %s14 = sphi 0, %s18
      %p15 = scmp.ge.s32.totalorder %s14, 6
      %s21 = sphi 0, %s33
      %s22 = sphi 0, %s29
      %s23 = sphi 0, %s21
      %s24 = sphi 0, %s22
      %s25 = sphi 0, %s23
      %s26 = sphi 0, %s24
      %s38 = sphi 0, %s40
      %s41 = sphi 0, %s38
      %s42 = sphi 0, %s41
      %s58 = sphi 0, %s42
      %s62 = sphi 0, %s62
      %s64 = sphi 0, %s62
      %s65 = sphi 0, %s64
      %s79 = sphi 0, %s65
      %s83 = sphi 0, %s83
      %s85 = sphi 0, %s83
      %s86 = sphi 0, %s85
      %s100 = sphi 0, %s86
      %s104 = sphi 0, %s104
      %s106 = sphi 0, %s104
      %s107 = sphi 0, %s106
      %s121 = sphi 0, %s107
      %s125 = sphi 0, %s125
      %s127 = sphi 0, %s125
      %s128 = sphi 0, %s127
      %s142 = sphi 0, %s128
      %s148 = sphi 0, %s150
      %s151 = sphi 0, %s148
      %s152 = sphi 0, %s151
      %s168 = sphi 0, %s152
    $region4: #{tpu_custom_call.1} parent=1 // loop_header_branch
      %17 = sbr.rel (%p15) target = $region8
    $region5: #{tpu_custom_call.1} parent=1 // loop_body
      %s19 = ssub.s32 %s14, 1
      %s20 = ssub.s32 %s14, 2
      %s27 = sadd.s32 1, %s22
      %p28 = scmp.ge.s32.totalorder %s27, 2
      %s29 = scalar_select %p28, 0, %s27
      %s30 = sadd.s32 1, %s21
      %s31 = scalar_select %p28, %s30, %s21
      %p32 = scmp.ge.s32.totalorder %s31, 2
      %s33 = scalar_select %p32, 0, %s31
      %s34 = ssub.s32 %s21, %s33
      %s35 = ssub.s32 %s22, %s29
      %s36 = sor.u32 %s34, %s35
      %p37 = scmp.eq.s32.totalorder %s36, 0
      %s39 = sadd.s32 %s38, 1
      %s40 = scalar_select %p37, %s38, %s39
      %p43 = pneg %p37
      %p44 = scmp.eq.s32.totalorder %s14, 3
      %p45 = por %p43, %p44
      %p46 = scmp.ne.s32.totalorder %s38, %s41
      %p47 = scmp.eq.s32.totalorder %s14, 0
      %p48 = por %p46, %p47
      %p49 = scmp.ne.s32.totalorder %s38, %s41
      %p50 = scmp.eq.s32.totalorder %s19, 3
      %p51 = por %p49, %p50
      %p52 = scmp.ne.s32.totalorder %s41, %s42
      %p53 = scmp.eq.s32.totalorder %s19, 0
      %p54 = por %p52, %p53
      %p55 = scmp.ne.s32.totalorder %s41, %s42
      %p56 = scmp.eq.s32.totalorder %s20, 3
      %p57 = por %p55, %p56
      %p59 = scmp.ne.s32.totalorder %s42, %s58
      %p60 = scmp.eq.s32.totalorder %s20, 0
      %p61 = por %p59, %p60
      %s63 = sadd.s32 %s62, 1
      %p66 = scmp.eq.s32.totalorder %s14, 3
      %p67 = scmp.ne.s32.totalorder %s62, %s64
      %p68 = scmp.eq.s32.totalorder %s14, 0
      %p69 = por %p67, %p68
      %p70 = scmp.ne.s32.totalorder %s62, %s64
      %p71 = scmp.eq.s32.totalorder %s19, 3
      %p72 = por %p70, %p71
      %p73 = scmp.ne.s32.totalorder %s64, %s65
      %p74 = scmp.eq.s32.totalorder %s19, 0
      %p75 = por %p73, %p74
      %p76 = scmp.ne.s32.totalorder %s64, %s65
      %p77 = scmp.eq.s32.totalorder %s20, 3
      %p78 = por %p76, %p77
      %p80 = scmp.ne.s32.totalorder %s65, %s79
      %p81 = scmp.eq.s32.totalorder %s20, 0
      %p82 = por %p80, %p81
      %s84 = sadd.s32 %s83, 1
      %p87 = scmp.eq.s32.totalorder %s14, 3
      %p88 = scmp.ne.s32.totalorder %s83, %s85
      %p89 = scmp.eq.s32.totalorder %s14, 0
      %p90 = por %p88, %p89
      %p91 = scmp.ne.s32.totalorder %s83, %s85
      %p92 = scmp.eq.s32.totalorder %s19, 3
      %p93 = por %p91, %p92
      %p94 = scmp.ne.s32.totalorder %s85, %s86
      %p95 = scmp.eq.s32.totalorder %s19, 0
      %p96 = por %p94, %p95
      %p97 = scmp.ne.s32.totalorder %s85, %s86
      %p98 = scmp.eq.s32.totalorder %s20, 3
      %p99 = por %p97, %p98
      %p101 = scmp.ne.s32.totalorder %s86, %s100
      %p102 = scmp.eq.s32.totalorder %s20, 0
      %p103 = por %p101, %p102
      %s105 = sadd.s32 %s104, 1
      %p108 = scmp.eq.s32.totalorder %s14, 3
      %p109 = scmp.ne.s32.totalorder %s104, %s106
      %p110 = scmp.eq.s32.totalorder %s14, 0
      %p111 = por %p109, %p110
      %p112 = scmp.ne.s32.totalorder %s104, %s106
      %p113 = scmp.eq.s32.totalorder %s19, 3
      %p114 = por %p112, %p113
      %p115 = scmp.ne.s32.totalorder %s106, %s107
      %p116 = scmp.eq.s32.totalorder %s19, 0
      %p117 = por %p115, %p116
      %p118 = scmp.ne.s32.totalorder %s106, %s107
      %p119 = scmp.eq.s32.totalorder %s20, 3
      %p120 = por %p118, %p119
      %p122 = scmp.ne.s32.totalorder %s107, %s121
      %p123 = scmp.eq.s32.totalorder %s20, 0
      %p124 = por %p122, %p123
      %s126 = sadd.s32 %s125, 1
      %p129 = scmp.eq.s32.totalorder %s14, 3
      %p130 = scmp.ne.s32.totalorder %s125, %s127
      %p131 = scmp.eq.s32.totalorder %s14, 0
      %p132 = por %p130, %p131
      %p133 = scmp.ne.s32.totalorder %s125, %s127
      %p134 = scmp.eq.s32.totalorder %s19, 3
      %p135 = por %p133, %p134
      %p136 = scmp.ne.s32.totalorder %s127, %s128
      %p137 = scmp.eq.s32.totalorder %s19, 0
      %p138 = por %p136, %p137
      %p139 = scmp.ne.s32.totalorder %s127, %s128
      %p140 = scmp.eq.s32.totalorder %s20, 3
      %p141 = por %p139, %p140
      %p143 = scmp.ne.s32.totalorder %s128, %s142
      %p144 = scmp.eq.s32.totalorder %s20, 0
      %p145 = por %p143, %p144
      %s146 = ssub.s32 %s21, %s33
      %p147 = scmp.eq.s32.totalorder %s146, 0
      %s149 = sadd.s32 %s148, 1
      %s150 = scalar_select %p147, %s148, %s149
      %p153 = pneg %p147
      %p154 = scmp.eq.s32.totalorder %s14, 3
      %p155 = por %p153, %p154
      %p156 = scmp.ne.s32.totalorder %s148, %s151
      %p157 = scmp.eq.s32.totalorder %s14, 0
      %p158 = por %p156, %p157
      %p159 = scmp.ne.s32.totalorder %s148, %s151
      %p160 = scmp.eq.s32.totalorder %s19, 3
      %p161 = por %p159, %p160
      %p162 = scmp.ne.s32.totalorder %s151, %s152
      %p163 = scmp.eq.s32.totalorder %s19, 0
      %p164 = por %p162, %p163
      %p165 = scmp.ne.s32.totalorder %s151, %s152
      %p166 = scmp.eq.s32.totalorder %s20, 3
      %p167 = por %p165, %p166
      %p169 = scmp.ne.s32.totalorder %s152, %s168
      %p170 = scmp.eq.s32.totalorder %s20, 0
      %p171 = por %p169, %p170
      %p172 = scmp.le.s32.totalorder 1, %s14
      %p173 = scmp.lt.s32.totalorder %s14, 5
      %p174 = pnand %p172, %p173
      %p175 = pneg %p174
      // Predicated region
      $region9: #{tpu_custom_call.1} parent=5 // pred_check
        _
      $region10: #{tpu_custom_call.1} parent=5 // pred_check_branch
        %177 = sbr.rel (%p174) target = $region12
      $region11: #{tpu_custom_call.1} parent=5 // pred_region
        %s178 = ssub.s32 %s14, 1
        // Predicated region
        $region13: #{tpu_custom_call.1} parent=11 // pred_check
          %p179 = pneg %p75
        $region14: #{tpu_custom_call.1} parent=11 // pred_check_branch
          %181 = sbr.rel (%p179) target = $region16
        $region15: #{tpu_custom_call.1} parent=11 // pred_region
          _
        $region16: #{tpu_custom_call.1} parent=11 // pred_fallthru
          _
        // Predicated region
        $region17: #{tpu_custom_call.1} parent=11 // pred_check
          %p182 = pneg %p96
        $region18: #{tpu_custom_call.1} parent=11 // pred_check_branch
          %184 = sbr.rel (%p182) target = $region20
        $region19: #{tpu_custom_call.1} parent=11 // pred_region
          _
        $region20: #{tpu_custom_call.1} parent=11 // pred_fallthru
          _
        // Predicated region
        $region21: #{tpu_custom_call.1} parent=11 // pred_check
          %p185 = pneg %p117
        $region22: #{tpu_custom_call.1} parent=11 // pred_check_branch
          %187 = sbr.rel (%p185) target = $region24
        $region23: #{tpu_custom_call.1} parent=11 // pred_region
          _
        $region24: #{tpu_custom_call.1} parent=11 // pred_fallthru
          _
        // Predicated region
        $region25: #{tpu_custom_call.1} parent=11 // pred_check
          %p188 = pneg %p138
        $region26: #{tpu_custom_call.1} parent=11 // pred_check_branch
          %190 = sbr.rel (%p188) target = $region28
        $region27: #{tpu_custom_call.1} parent=11 // pred_region
          _
        $region28: #{tpu_custom_call.1} parent=11 // pred_fallthru
          _
      $region12: #{tpu_custom_call.1} parent=5 // pred_fallthru
        _
      %p191 = scmp.lt.s32.totalorder %s14, 4
      // Predicated region
      $region29: #{tpu_custom_call.1} parent=5 // pred_check
        %p192 = pneg %p191
      $region30: #{tpu_custom_call.1} parent=5 // pred_check_branch
        %194 = sbr.rel (%p192) target = $region32
      $region31: #{tpu_custom_call.1} parent=5 // pred_region
        // Predicated region
        $region33: #{tpu_custom_call.1} parent=31 // pred_check
          %p195 = pneg %p48
        $region34: #{tpu_custom_call.1} parent=31 // pred_check_branch
          %197 = sbr.rel (%p195) target = $region36
        $region35: #{tpu_custom_call.1} parent=31 // pred_region
          %s198 = smul.u32 8, %s22
          %p199 = scmp.lt.s32.totalorder %s21, 1
          %s200 = scalar_select %p199, %s21, 1
          %p201 = scmp.lt.s32.totalorder %s198, 15
          %s202 = scalar_select %p201, %s198, 15
          %s203 = smul.addr %s200, 16
          %s204 = sadd.s32 %s202, %s203
          %s205 = smul.addr %s204, 8
          %s206 = scalar_lea.vmem %s0, %s205
          %s207 = smul.u32 8, %s22
        $region36: #{tpu_custom_call.1} parent=31 // pred_fallthru
          _
      $region32: #{tpu_custom_call.1} parent=5 // pred_fallthru
        _
      %p208 = scmp.le.s32.totalorder 1, %s14
      %p209 = scmp.lt.s32.totalorder %s14, 5
      %p210 = pnand %p208, %p209
      %p211 = pneg %p210
      // Predicated region
      $region37: #{tpu_custom_call.1} parent=5 // pred_check
        _
      $region38: #{tpu_custom_call.1} parent=5 // pred_check_branch
        %213 = sbr.rel (%p210) target = $region40
      $region39: #{tpu_custom_call.1} parent=5 // pred_region
        %s214 = ssub.s32 %s14, 1
        %s215 = smul.u32 8, %s24
        %p216 = scmp.lt.s32.totalorder %s23, 1
        %s217 = scalar_select %p216, %s23, 1
        %p218 = scmp.lt.s32.totalorder %s215, 15
        %s219 = scalar_select %p218, %s215, 15
        %s220 = smul.addr %s217, 16
        %s221 = sadd.s32 %s219, %s220
        %s222 = smul.addr %s221, 8
        %s223 = scalar_lea.vmem %s0, %s222
        %p224 = pneg %p54
        %p225 = pneg %p51
        %p226 = pneg %p75
        %p227 = pneg %p72
        %p228 = pneg %p96
        %p229 = pneg %p93
        %p230 = pneg %p117
        %p231 = pneg %p114
        %p232 = pneg %p138
        %p233 = pneg %p135
        %p234 = pneg %p164
        %p235 = pneg %p161
        %s236 = sand.u32 %s151, 1
        %s237 = scalar_lea.sflag [#allocation3], %s236
        %s238 = sand.u32 %s151, 1
        %s239 = smul.addr %s238, 8
        %s240 = scalar_lea.vmem [#allocation2], %s239
        %s241 = smul.u32 8, %s24
        %p242 = scmp.lt.s32.totalorder %s23, 1
        %s243 = scalar_select %p242, %s23, 1
        %p244 = scmp.lt.s32.totalorder %s241, 15
        %s245 = scalar_select %p244, %s241, 15
        %s246 = smul.addr %s243, 16
        %s247 = sadd.s32 %s245, %s246
        %s248 = smul.addr %s247, 8
        %s249 = scalar_lea.vmem %s0, %s248
        %s250 = smul.u32 8, %s24
        %p252 = scmp.eq.s32.totalorder %s24, 0
        // Predicated region
        $region41: #{tpu_custom_call.1} parent=39 // pred_check
          %p253 = pneg %p252
        $region42: #{tpu_custom_call.1} parent=39 // pred_check_branch
          %255 = sbr.rel (%p253) target = $region44
        $region43: #{tpu_custom_call.1} parent=39 // pred_region
          %256 = vst [vmem:[%s240] sm:$0xff] -inf
        $region44: #{tpu_custom_call.1} parent=39 // pred_fallthru
          _
        %v257 = vld [vmem:[%s249] sm:$0xff]
        %v258 = vld [vmem:[%s249 + $0x8] sm:$0xff]
        %v259 = vld [vmem:[%s249 + $0x10] sm:$0xff]
        %v260 = vld [vmem:[%s249 + $0x18] sm:$0xff]
        %v261 = vld [vmem:[%s249 + $0x20] sm:$0xff]
        %v262 = vld [vmem:[%s249 + $0x28] sm:$0xff]
        %v263 = vld [vmem:[%s249 + $0x30] sm:$0xff]
        %v264 = vld [vmem:[%s249 + $0x38] sm:$0xff]
        %v265 = vld [vmem:[%s1] sm:$0x1]
        %v266 = vld [vmem:[%s2] sm:$0x1]
        %vm267 = vcmask 261120
        %v268 = vsel %vm267, %v257, 0.0
        %269 = vadd.xlane.f32.xlu0 %v268
        %v270 = vpop.xlane.xlu0 %269
        %v271 = vsel %vm267, %v258, 0.0
        %272 = vadd.xlane.f32.xlu0 %v271
        %v273 = vpop.xlane.xlu0 %272
        %v274 = vsel %vm267, %v259, 0.0
        %275 = vadd.xlane.f32.xlu0 %v274
        %v276 = vpop.xlane.xlu0 %275
        %v277 = vsel %vm267, %v260, 0.0
        %278 = vadd.xlane.f32.xlu0 %v277
        %v279 = vpop.xlane.xlu0 %278
        %v280 = vsel %vm267, %v261, 0.0
        %281 = vadd.xlane.f32.xlu0 %v280
        %v282 = vpop.xlane.xlu0 %281
        %v283 = vsel %vm267, %v262, 0.0
        %284 = vadd.xlane.f32.xlu0 %v283
        %v285 = vpop.xlane.xlu0 %284
        %v286 = vsel %vm267, %v263, 0.0
        %287 = vadd.xlane.f32.xlu0 %v286
        %v288 = vpop.xlane.xlu0 %287
        %v289 = vsel %vm267, %v264, 0.0
        %290 = vadd.xlane.f32.xlu0 %v289
        %v291 = vpop.xlane.xlu0 %290
        %v292 = vrcp.pop 32.0
        %v293 = vmul.f32 %v270, %v292
        %v294 = vmul.f32 %v273, %v292
        %v295 = vmul.f32 %v276, %v292
        %v296 = vmul.f32 %v279, %v292
        %v297 = vmul.f32 %v282, %v292
        %v298 = vmul.f32 %v285, %v292
        %v299 = vmul.f32 %v288, %v292
        %v300 = vmul.f32 %v291, %v292
        %v301 = vsub.f32 %v257, %v293
        %v302 = vsub.f32 %v258, %v294
        %v303 = vsub.f32 %v259, %v295
        %v304 = vsub.f32 %v260, %v296
        %v305 = vsub.f32 %v261, %v297
        %v306 = vsub.f32 %v262, %v298
        %v307 = vsub.f32 %v263, %v299
        %v308 = vsub.f32 %v264, %v300
        %v309 = vmul.f32 %v301, %v301
        %v310 = vmul.f32 %v302, %v302
        %v311 = vmul.f32 %v303, %v303
        %v312 = vmul.f32 %v304, %v304
        %v313 = vmul.f32 %v305, %v305
        %v314 = vmul.f32 %v306, %v306
        %v315 = vmul.f32 %v307, %v307
        %v316 = vmul.f32 %v308, %v308
        %v317 = vsel %vm267, %v309, 0.0
        %318 = vadd.xlane.f32.xlu0 %v317
        %v319 = vpop.xlane.xlu0 %318
        %v320 = vsel %vm267, %v310, 0.0
        %321 = vadd.xlane.f32.xlu0 %v320
        %v322 = vpop.xlane.xlu0 %321
        %v323 = vsel %vm267, %v311, 0.0
        %324 = vadd.xlane.f32.xlu0 %v323
        %v325 = vpop.xlane.xlu0 %324
        %v326 = vsel %vm267, %v312, 0.0
        %327 = vadd.xlane.f32.xlu0 %v326
        %v328 = vpop.xlane.xlu0 %327
        %v329 = vsel %vm267, %v313, 0.0
        %330 = vadd.xlane.f32.xlu0 %v329
        %v331 = vpop.xlane.xlu0 %330
        %v332 = vsel %vm267, %v314, 0.0
        %333 = vadd.xlane.f32.xlu0 %v332
        %v334 = vpop.xlane.xlu0 %333
        %v335 = vsel %vm267, %v315, 0.0
        %336 = vadd.xlane.f32.xlu0 %v335
        %v337 = vpop.xlane.xlu0 %336
        %v338 = vsel %vm267, %v316, 0.0
        %339 = vadd.xlane.f32.xlu0 %v338
        %v340 = vpop.xlane.xlu0 %339
        %v341 = vmul.f32 %v319, %v292
        %v342 = vmul.f32 %v322, %v292
        %v343 = vmul.f32 %v325, %v292
        %v344 = vmul.f32 %v328, %v292
        %v345 = vmul.f32 %v331, %v292
        %v346 = vmul.f32 %v334, %v292
        %v347 = vmul.f32 %v337, %v292
        %v348 = vmul.f32 %v340, %v292
        %v349 = vadd.f32 %v341, 1e-05
        %v350 = vadd.f32 %v342, 1e-05
        %v351 = vadd.f32 %v343, 1e-05
        %v352 = vadd.f32 %v344, 1e-05
        %v353 = vadd.f32 %v345, 1e-05
        %v354 = vadd.f32 %v346, 1e-05
        %v355 = vadd.f32 %v347, 1e-05
        %v356 = vadd.f32 %v348, 1e-05
        %v357 = vrsqrt.pop %v349
        %v358 = vrsqrt.pop %v350
        %v359 = vrsqrt.pop %v351
        %v360 = vrsqrt.pop %v352
        %v361 = vrsqrt.pop %v353
        %v362 = vrsqrt.pop %v354
        %v363 = vrsqrt.pop %v355
        %v364 = vrsqrt.pop %v356
        %v365 = vmul.f32 %v301, %v357
        %v366 = vmul.f32 %v302, %v358
        %v367 = vmul.f32 %v303, %v359
        %v368 = vmul.f32 %v304, %v360
        %v369 = vmul.f32 %v305, %v361
        %v370 = vmul.f32 %v306, %v362
        %v371 = vmul.f32 %v307, %v363
        %v372 = vmul.f32 %v308, %v364
        %v374 = vlaneseq
        %v375 = vshrl.u32 %v374, 7
        %v376 = vsub.s32 0, %v375
        %v377 = vrot.slane %v265, %v376
        %v379 = vmul.f32 %v365, %v377
        %v380 = vmul.f32 %v366, %v377
        %v381 = vmul.f32 %v367, %v377
        %v382 = vmul.f32 %v368, %v377
        %v383 = vmul.f32 %v369, %v377
        %v384 = vmul.f32 %v370, %v377
        %v385 = vmul.f32 %v371, %v377
        %v386 = vmul.f32 %v372, %v377
        %v388 = vlaneseq
        %v389 = vshrl.u32 %v388, 7
        %v390 = vsub.s32 0, %v389
        %v391 = vrot.slane %v266, %v390
        %v393 = vadd.f32 %v379, %v391
        %v394 = vadd.f32 %v380, %v391
        %v395 = vadd.f32 %v381, %v391
        %v396 = vadd.f32 %v382, %v391
        %v397 = vadd.f32 %v383, %v391
        %v398 = vadd.f32 %v384, %v391
        %v399 = vadd.f32 %v385, %v391
        %v400 = vadd.f32 %v386, %v391
        %v401 = vpack.c.bf16 %v394, %v393
        %v402 = vpack.c.bf16 %v396, %v395
        %v403 = vpack.c.bf16 %v398, %v397
        %v404 = vpack.c.bf16 %v400, %v399
        %v405 = vld [vmem:[%s3] sm:$0xf]
        %v406 = vld [vmem:[%s3 + $0x4] sm:$0xf]
        %v407 = vld [vmem:[%s3 + $0x8] sm:$0xf]
        %v408 = vld [vmem:[%s3 + $0xc] sm:$0xf]
        %v413 = vunpack.c.l.b16 %v405
        %v414 = vunpack.c.l.b16 %v406
        %v415 = vunpack.c.l.b16 %v407
        %v416 = vunpack.c.l.b16 %v408
        %v417 = vpack.c.b16 %v414, %v413
        %v418 = vpack.c.b16 %v416, %v415
        %v422 = vsel %vm267, %v401, 0
        %v425 = vsel %vm267, %v402, 0
        %v428 = vsel %vm267, %v403, 0
        %v431 = vsel %vm267, %v404, 0
        %433 = vmatprep.subr.bf16.mxu0 0
        %434 = vmatpush1.bf16.msra.mxu0 0
        %435 = vmatprep.subr.bf16.mxu0 0
        %436 = vmatpush1.bf16.msra.mxu0 0
        %437 = vmatprep.subr.bf16.mxu0 0
        %438 = vmatpush1.bf16.msra.mxu0 0
        %439 = vmatprep.subr.bf16.mxu0 0
        %440 = vmatpush1.bf16.msra.mxu0 0
        %441 = vmatprep.subr.bf16.mxu0 0
        %442 = vmatpush1.bf16.msra.mxu0 0
        %443 = vmatprep.subr.bf16.mxu0 0
        %444 = vmatpush1.bf16.msra.mxu0 0
        %445 = vmatprep.subr.bf16.mxu0 0
        %446 = vmatpush1.bf16.msra.mxu0 %v418
        %447 = vmatprep.subr.bf16.mxu0 0
        %448 = vmatpush1.bf16.msra.mxu0 %v417
        %449 = vmatprep.subr.bf16.mxu0 0
        %450 = vmatpush2.bf16.msra.mxu0 0
        %451 = vmatprep.subr.bf16.mxu0 0
        %452 = vmatpush2.bf16.msra.mxu0 0
        %453 = vmatprep.subr.bf16.mxu0 0
        %454 = vmatpush2.bf16.msra.mxu0 0
        %455 = vmatprep.subr.bf16.mxu0 0
        %456 = vmatpush2.bf16.msra.mxu0 0
        %457 = vmatprep.subr.bf16.mxu0 0
        %458 = vmatpush2.bf16.msra.mxu0 0
        %459 = vmatprep.subr.bf16.mxu0 0
        %460 = vmatpush2.bf16.msra.mxu0 0
        %461 = vmatprep.subr.bf16.mxu0 0
        %462 = vmatpush2.bf16.msra.mxu0 0
        %463 = vmatprep.subr.bf16.mxu0 0
        %464 = vmatpush2.bf16.msra.mxu0 0
        %465 = vmatprep.mubr.bf16.mxu0 0
        %466 = vmatmul.mubr.bf16.gmra.mxu0 %v422
        %v467 = vpop.f32.mrf.mxu0
        %v468 = vadd.f32 0.0, %v467
        %v469 = vpop.f32.mrf.mxu0
        %v470 = vpop.f32.mrf.mxu0
        %v471 = vadd.f32 0.0, %v470
        %v472 = vpop.f32.mrf.mxu0
        %473 = vmatprep.mubr.bf16.mxu0 0
        %474 = vmatmul.mubr.bf16.gmra.mxu0 %v425
        %v475 = vpop.f32.mrf.mxu0
        %v476 = vadd.f32 0.0, %v475
        %v477 = vpop.f32.mrf.mxu0
        %v478 = vpop.f32.mrf.mxu0
        %v479 = vadd.f32 0.0, %v478
        %v480 = vpop.f32.mrf.mxu0
        %481 = vmatprep.mubr.bf16.mxu0 0
        %482 = vmatmul.mubr.bf16.gmra.mxu0 %v428
        %v483 = vpop.f32.mrf.mxu0
        %v484 = vadd.f32 0.0, %v483
        %v485 = vpop.f32.mrf.mxu0
        %v486 = vpop.f32.mrf.mxu0
        %v487 = vadd.f32 0.0, %v486
        %v488 = vpop.f32.mrf.mxu0
        %489 = vmatprep.mubr.bf16.mxu0 0
        %490 = vmatmul.mubr.bf16.gmra.mxu0 %v431
        %v491 = vpop.f32.mrf.mxu0
        %v492 = vadd.f32 0.0, %v491
        %v493 = vpop.f32.mrf.mxu0
        %v494 = vpop.f32.mrf.mxu0
        %v495 = vadd.f32 0.0, %v494
        %v496 = vpop.f32.mrf.mxu0
        %497 = vdwg.mxu0
        %v498 = vld [vmem:[%s4] sm:$0xff]
        %v499 = vld [vmem:[%s4 + $0x8] sm:$0xff]
        %v500 = vld [vmem:[%s4 + $0x10] sm:$0xff]
        %v501 = vld [vmem:[%s4 + $0x18] sm:$0xff]
        %v503 = vsel %vm267, %v468, 0
        %v506 = vsel %vm267, %v471, 0
        %v509 = vsel %vm267, %v476, 0
        %v512 = vsel %vm267, %v479, 0
        %v515 = vsel %vm267, %v484, 0
        %v518 = vsel %vm267, %v487, 0
        %v521 = vsel %vm267, %v492, 0
        %v524 = vsel %vm267, %v495, 0
        %526 = vmatprep.subr.mxu0 0.0
        %527 = vmatpush1.msra.mxu0 0.0
        %528 = vmatprep.subr.mxu0 0.0
        %529 = vmatpush1.msra.mxu0 0.0
        %530 = vmatprep.subr.mxu0 0.0
        %531 = vmatpush1.msra.mxu0 0.0
        %532 = vmatprep.subr.mxu0 0.0
        %533 = vmatpush1.msra.mxu0 0.0
        %534 = vmatprep.subr.mxu0 0.0
        %535 = vmatpush1.msra.mxu0 0.0
        %536 = vmatprep.subr.mxu0 0.0
        %537 = vmatpush1.msra.mxu0 0.0
        %538 = vmatprep.subr.mxu0 0.0
        %539 = vmatpush1.msra.mxu0 0.0
        %540 = vmatprep.subr.mxu0 0.0
        %541 = vmatpush1.msra.mxu0 0.0
        %542 = vmatprep.subr.mxu0 0.0
        %543 = vmatpush1.msra.mxu0 0.0
        %544 = vmatprep.subr.mxu0 0.0
        %545 = vmatpush1.msra.mxu0 0.0
        %546 = vmatprep.subr.mxu0 0.0
        %547 = vmatpush1.msra.mxu0 0.0
        %548 = vmatprep.subr.mxu0 0.0
        %549 = vmatpush1.msra.mxu0 0.0
        %550 = vmatprep.subr.mxu0 0.0
        %551 = vmatpush1.msra.mxu0 %v501
        %552 = vmatprep.subr.mxu0 0.0
        %553 = vmatpush1.msra.mxu0 %v500
        %554 = vmatprep.subr.mxu0 0.0
        %555 = vmatpush1.msra.mxu0 %v499
        %556 = vmatprep.subr.mxu0 0.0
        %557 = vmatpush1.msra.mxu0 %v498
        %558 = vmatprep.subr.mxu0 0.0
        %559 = vmatpush2.msra.mxu0 0.0
        %560 = vmatprep.subr.mxu0 0.0
        %561 = vmatpush2.msra.mxu0 0.0
        %562 = vmatprep.subr.mxu0 0.0
        %563 = vmatpush2.msra.mxu0 0.0
        %564 = vmatprep.subr.mxu0 0.0
        %565 = vmatpush2.msra.mxu0 0.0
        %566 = vmatprep.subr.mxu0 0.0
        %567 = vmatpush2.msra.mxu0 0.0
        %568 = vmatprep.subr.mxu0 0.0
        %569 = vmatpush2.msra.mxu0 0.0
        %570 = vmatprep.subr.mxu0 0.0
        %571 = vmatpush2.msra.mxu0 0.0
        %572 = vmatprep.subr.mxu0 0.0
        %573 = vmatpush2.msra.mxu0 0.0
        %574 = vmatprep.subr.mxu0 0.0
        %575 = vmatpush2.msra.mxu0 0.0
        %576 = vmatprep.subr.mxu0 0.0
        %577 = vmatpush2.msra.mxu0 0.0
        %578 = vmatprep.subr.mxu0 0.0
        %579 = vmatpush2.msra.mxu0 0.0
        %580 = vmatprep.subr.mxu0 0.0
        %581 = vmatpush2.msra.mxu0 0.0
        %582 = vmatprep.subr.mxu0 0.0
        %583 = vmatpush2.msra.mxu0 0.0
        %584 = vmatprep.subr.mxu0 0.0
        %585 = vmatpush2.msra.mxu0 0.0
        %586 = vmatprep.subr.mxu0 0.0
        %587 = vmatpush2.msra.mxu0 0.0
        %588 = vmatprep.subr.mxu0 0.0
        %589 = vmatpush2.msra.mxu0 0.0
        %590 = vmatprep.mubr.f32.mxu0 0.0
        %591 = vmatmul.mubr.f32.gmra.mxu0 %v503
        %v592 = vpop.f32.mrf.mxu0
        %v593 = vadd.f32 0.0, %v592
        %v594 = vpop.f32.mrf.mxu0
        %595 = vmatprep.mubr.f32.mxu0 0.0
        %596 = vmatmul.mubr.f32.gmra.mxu0 %v506
        %v597 = vpop.f32.mrf.mxu0
        %v598 = vadd.f32 0.0, %v597
        %v599 = vpop.f32.mrf.mxu0
        %600 = vmatprep.mubr.f32.mxu0 0.0
        %601 = vmatmul.mubr.f32.gmra.mxu0 %v509
        %v602 = vpop.f32.mrf.mxu0
        %v603 = vadd.f32 0.0, %v602
        %v604 = vpop.f32.mrf.mxu0
        %605 = vmatprep.mubr.f32.mxu0 0.0
        %606 = vmatmul.mubr.f32.gmra.mxu0 %v512
        %v607 = vpop.f32.mrf.mxu0
        %v608 = vadd.f32 0.0, %v607
        %v609 = vpop.f32.mrf.mxu0
        %610 = vmatprep.mubr.f32.mxu0 0.0
        %611 = vmatmul.mubr.f32.gmra.mxu0 %v515
        %v612 = vpop.f32.mrf.mxu0
        %v613 = vadd.f32 0.0, %v612
        %v614 = vpop.f32.mrf.mxu0
        %615 = vmatprep.mubr.f32.mxu0 0.0
        %616 = vmatmul.mubr.f32.gmra.mxu0 %v518
        %v617 = vpop.f32.mrf.mxu0
        %v618 = vadd.f32 0.0, %v617
        %v619 = vpop.f32.mrf.mxu0
        %620 = vmatprep.mubr.f32.mxu0 0.0
        %621 = vmatmul.mubr.f32.gmra.mxu0 %v521
        %v622 = vpop.f32.mrf.mxu0
        %v623 = vadd.f32 0.0, %v622
        %v624 = vpop.f32.mrf.mxu0
        %625 = vmatprep.mubr.f32.mxu0 0.0
        %626 = vmatmul.mubr.f32.gmra.mxu0 %v524
        %v627 = vpop.f32.mrf.mxu0
        %v628 = vadd.f32 0.0, %v627
        %v629 = vpop.f32.mrf.mxu0
        %630 = vdwg.mxu0
        %v631 = vld [vmem:[%s240] sm:$0xff]
        %vm632 = vcmask 523264
        %v633 = vsel %vm632, %v593, -inf
        %v634 = vsel %vm632, %v598, -inf
        %v635 = vsel %vm632, %v603, -inf
        %v636 = vsel %vm632, %v608, -inf
        %v637 = vsel %vm632, %v613, -inf
        %v638 = vmax.f32 %v633, %v637
        %v639 = vsel %vm632, %v618, -inf
        %v640 = vmax.f32 %v634, %v639
        %v641 = vsel %vm632, %v623, -inf
        %v642 = vmax.f32 %v635, %v641
        %v643 = vsel %vm632, %v628, -inf
        %v644 = vmax.f32 %v636, %v643
        %v645 = vmax.f32 %v638, %v640
        %v646 = vmax.f32 %v642, %v644
        %v647 = vmax.f32 %v645, %v646
        %648 = vmax.xlane.f32.xlu0 %v647
        %v649 = vpop.xlane.xlu0 %648
        %v650 = vrot.slane %v649, 4
        %v651 = vmax.f32 %v649, %v650
        %v652 = vrot.slane %v651, 2
        %v653 = vmax.f32 %v651, %v652
        %v654 = vrot.slane %v653, 1
        %v655 = vmax.f32 %v653, %v654
        %s656 = vtos %v655
        %v657 = vstv %s656
        %v658 = vmax.f32 %v631, %v657
        %659 = vst [vmem:[%s240] sm:$0xff] %v658
        %s660 = sand.u32 %s151, 1
        %s661 = scalar_lea.sflag [#allocation3], %s660
        %s662 = sand.u32 %s151, 1
        %s663 = smul.addr %s662, 8
        %s664 = scalar_lea.vmem [#allocation2], %s663
        // Predicated region
        $region45: #{tpu_custom_call.1} parent=39 // pred_check
          %p665 = pneg %p161
        $region46: #{tpu_custom_call.1} parent=39 // pred_check_branch
          %667 = sbr.rel (%p665) target = $region48
        $region47: #{tpu_custom_call.1} parent=39 // pred_region
          %s669 = ssub.s32 128, 128
          %670 = vsyncadd %s661, %s669
          %s671 = smul.addr %s23, 128
          %s672 = scalar_lea.hbm %s5, %s671
          %s674 = sshll.u32 %s664, 4
          %s675 = int_to_ptr.vmem [resolvable:$true] %s674
          %677 = dma.vmem_to_hbm [thread:$0]  %s675, 128, %s672, %s661
        $region48: #{tpu_custom_call.1} parent=39 // pred_fallthru
          _
      $region40: #{tpu_custom_call.1} parent=5 // pred_fallthru
        _
      %p678 = scmp.le.s32.totalorder 2, %s14
      // Predicated region
      $region49: #{tpu_custom_call.1} parent=5 // pred_check
        %p679 = pneg %p678
      $region50: #{tpu_custom_call.1} parent=5 // pred_check_branch
        %681 = sbr.rel (%p679) target = $region52
      $region51: #{tpu_custom_call.1} parent=5 // pred_region
        %s682 = ssub.s32 %s14, 2
        // Predicated region
        $region53: #{tpu_custom_call.1} parent=51 // pred_check
          %p683 = pneg %p167
        $region54: #{tpu_custom_call.1} parent=51 // pred_check_branch
          %685 = sbr.rel (%p683) target = $region56
        $region55: #{tpu_custom_call.1} parent=51 // pred_region
          %s686 = sand.u32 %s152, 1
          %s687 = scalar_lea.sflag [#allocation3], %s686
          %s688 = sand.u32 %s152, 1
          %s689 = smul.addr %s688, 8
          %s690 = scalar_lea.vmem [#allocation2], %s689
          %691 = dma.done %s687, 128
        $region56: #{tpu_custom_call.1} parent=51 // pred_fallthru
          _
      $region52: #{tpu_custom_call.1} parent=5 // pred_fallthru
        _
    $region6: #{tpu_custom_call.1} parent=1 // loop_footer
      %s18 = sadd.s32 1, %s14
    $region7: #{tpu_custom_call.1} parent=1 // loop_footer_branch
      %13 = sbr.rel target = $region3
    $region8: #{tpu_custom_call.1} parent=1 // loop_exit
      _
    %692 = vsyncpa [#allocation3], 1
    %s693 = scalar_lea.sflag [#allocation3], 1
    %694 = vsyncpa %s693, 1

</llo_original>
